<compile_context>
chip_gen: v7x
topology: tpu7x:2x2x1
jax: 0.10.0
libtpu: 0.0.40
codegen_flags: <defaults>
</compile_context>

<pallas_src>
import functools

import jax
import jax.numpy as jnp
from jax.experimental import pallas as pl
from jax.experimental.pallas import tpu as pltpu

_LANE = 128
_SUBLANE_F32 = 8


def _round_up(n, m):
    return (n + m - 1) // m * m


# ---------------------------------------------------------------------------------------
# Capability probes (explicit, construction-time; no silent retry around pallas_call).
# ---------------------------------------------------------------------------------------
def _probe_buffered_support():
    if not hasattr(pl, "Buffered"):
        return False
    try:
        pl.BlockSpec((_SUBLANE_F32, _LANE), lambda i: (0, 0), pipeline_mode=pl.Buffered(1))
    except TypeError:
        return False
    return True


_SUPPORTS_BUFFERED = _probe_buffered_support()


@functools.lru_cache(maxsize=1)
def _vmem_capacity_bytes():
    """Per-TensorCore VMEM capacity; conservative 64 MiB (v7x) fallback so we never
    request more than any supported generation physically has."""
    if hasattr(pltpu, "get_tpu_info"):
        try:
            cap = getattr(pltpu.get_tpu_info(), "vmem_capacity_bytes", None)
            if cap:
                return int(cap)
        except Exception:  # info query only -- fall back to the most conservative value
            pass
    return 64 * 1024 * 1024


# ---------------------------------------------------------------------------------------
# Kernel
# ---------------------------------------------------------------------------------------
def _mlp_kernel(x_ref, w1_ref, b1_ref, w2_ref, b2_ref, w3_ref, b3_ref, o_ref):
    mm_dtype = w1_ref.dtype  # matmul input dtype (bf16 by default); accumulation is f32

    # In-kernel cast of the activation (VPU has slack; halves x-related HBM traffic
    # versus a host-side materialized bf16 copy).
    x = x_ref[...].astype(mm_dtype)

    # Layer 1: Linear(input_size -> hidden_size) + ReLU   (bias/ReLU in f32; v5e-safe)
    h1 = jnp.dot(x, w1_ref[...], preferred_element_type=jnp.float32)
    h1 = jnp.maximum(h1 + b1_ref[...], 0.0)

    # Layer 2: Linear(hidden_size -> hidden_size // 2) + ReLU
    h2 = jnp.dot(h1.astype(mm_dtype), w2_ref[...], preferred_element_type=jnp.float32)
    h2 = jnp.maximum(h2 + b2_ref[...], 0.0)

    # Layer 3: Linear(hidden_size // 2 -> output_size)
    out = jnp.dot(h2.astype(mm_dtype), w3_ref[...], preferred_element_type=jnp.float32)
    o_ref[...] = (out + b3_ref[...]).astype(o_ref.dtype)

    # TODO(synk): on v6e, when hidden_size is large, the f32 h1/h2 intermediates could be
    # kept in bf16 (bf16 VPU available) to halve live-value footprint; do NOT do this on v5e.


# ---------------------------------------------------------------------------------------
# Wrapper
# ---------------------------------------------------------------------------------------
def prepare_params(w1, b1, w2, b2, w3, b3, matmul_dtype=jnp.bfloat16):
    """One-time cast (and lane-pad only if out_size >= 64) of the weights/biases so the
    per-forward path never re-streams them through HBM."""
    out_size = w3.shape[1]
    if out_size >= 64 and out_size % _LANE != 0:
        out_pad = _round_up(out_size, _LANE)
        w3 = jnp.pad(w3, ((0, 0), (0, out_pad - out_size)))
        b3 = jnp.pad(b3, ((0, 0), (0, out_pad - out_size)))
    return {
        "w1": w1.astype(matmul_dtype), "b1": b1.astype(jnp.float32),
        "w2": w2.astype(matmul_dtype), "b2": b2.astype(jnp.float32),
        "w3": w3.astype(matmul_dtype), "b3": b3.astype(jnp.float32),
        "out_size": int(out_size),
    }


@functools.partial(
    jax.jit, static_argnames=("batch_tile", "out_size", "single_buffer_weights")
)
def _mlp_forward_impl(x, w1m, b1f, w2m, b2f, w3m, b3f, *, batch_tile, out_size,
                      single_buffer_weights):
    B, in_sz = x.shape
    hid = w1m.shape[1]
    hid2 = w2m.shape[1]
    out_cols = w3m.shape[1]  # == out_size unless lane-padded in prepare_params

    mm_bytes = jnp.dtype(w1m.dtype).itemsize
    io_bytes = jnp.dtype(x.dtype).itemsize
    # dtype-correct sublane packing multiple (bf16 packs 16 rows per vreg, int8/fp8 -> 32)
    sub = 32 if mm_bytes == 1 else (16 if mm_bytes == 2 else _SUBLANE_F32)

    # ---- batch tile selection (all static) ----------------------------------------------
    bt = min(batch_tile, _round_up(B, sub))
    bt = max(sub, _round_up(bt, sub))
    if B >= 32:
        # Guarantee >= 2 grid steps so the "parallel" batch axis shards across both v7x
        # TensorCores (per-step overhead ~0.35 us -> essentially free; no effect v5e/v6e).
        bt = min(bt, _round_up(pl.cdiv(B, 2), sub))
    B_pad = _round_up(B, bt)
    grid = (B_pad // bt,)

    x_p = x if B_pad == B else jnp.pad(x, ((0, B_pad - B), (0, 0)))

    # ---- hardware-derived VMEM budget ----------------------------------------------------
    weight_mult = 1 if single_buffer_weights else 2
    weight_bytes = weight_mult * (in_sz * hid + hid * hid2 + hid2 * out_cols) * mm_bytes
    bias_bytes = weight_mult * (hid + hid2 + out_cols) * 4
    act_io_bytes = 2 * bt * (in_sz + out_cols) * io_bytes          # double-buffered x / out
    interm_bytes = bt * ((hid + hid2) * (4 + mm_bytes) + out_cols * 4)
    est = weight_bytes + bias_bytes + act_io_bytes + interm_bytes
    cap = _vmem_capacity_bytes()
    vmem_limit = int(min(max(int(1.2 * est), 32 * 1024 * 1024), int(0.875 * cap)))

    # TODO(synk): for large hidden_size (resident bf16 weights beyond ~40% of VMEM,
    # hit first on v7x's 64 MiB), add a trailing "arbitrary" reduction grid axis over the
    # hidden/K dims with a pl.when-guarded f32 VMEM accumulator instead of holding the
    # full weight matrices resident.

    # ---- block specs ----------------------------------------------------------------------
    def _const_idx(i):
        return (0, 0)

    if single_buffer_weights:
        def const_spec(shape):
            return pl.BlockSpec(shape, _const_idx, pipeline_mode=pl.Buffered(1))
    else:
        def const_spec(shape):
            return pl.BlockSpec(shape, _const_idx)

    out = pl.pallas_call(
        _mlp_kernel,
        out_shape=jax.ShapeDtypeStruct((B_pad, out_cols), x.dtype),
        grid_spec=pltpu.PrefetchScalarGridSpec(
            num_scalar_prefetch=0,
            grid=grid,
            in_specs=[
                pl.BlockSpec((bt, in_sz), lambda i: (i, 0)),  # x: batch-tiled, f32 in
                const_spec((in_sz, hid)),                     # w1 (grid-invariant)
                const_spec((1, hid)),                         # b1
                const_spec((hid, hid2)),                      # w2
                const_spec((1, hid2)),                        # b2
                const_spec((hid2, out_cols)),                 # w3
                const_spec((1, out_cols)),                    # b3
            ],
            out_specs=pl.BlockSpec((bt, out_cols), lambda i: (i, 0)),
        ),
        compiler_params=pltpu.CompilerParams(
            dimension_semantics=("parallel",),
            vmem_limit_bytes=vmem_limit,
        ),
    )(x_p, w1m, b1f, w2m, b2f, w3m, b3f)

    if B_pad != B or out_cols != out_size:
        out = out[:B, :out_size]
    return out


def mlp_forward(x, prepared, *, batch_tile=256):
    """x: (B, input_size) float32; `prepared` from prepare_params(). Returns (B, output_size)."""
    return _mlp_forward_impl(
        x,
        prepared["w1"], prepared["b1"],
        prepared["w2"], prepared["b2"],
        prepared["w3"], prepared["b3"],
        batch_tile=batch_tile,
        out_size=prepared["out_size"],
        single_buffer_weights=_SUPPORTS_BUFFERED,
    )


# ---------------------------------------------------------------------------------------
# Init + reference
# ---------------------------------------------------------------------------------------
def init_params(key, input_size, hidden_size, output_size, dtype=jnp.float32):
    """PyTorch-style (Kaiming-uniform-ish) init; weights stored as (in, out)."""
    ks = jax.random.split(key, 6)

    def lin(kw, kb, fan_in, fan_out):
        bound = 1.0 / jnp.sqrt(fan_in)
        w = jax.random.uniform(kw, (fan_in, fan_out), dtype, -bound, bound)
        b = jax.random.uniform(kb, (1, fan_out), dtype, -bound, bound)
        return w, b

    w1, b1 = lin(ks[0], ks[1], input_size, hidden_size)
    w2, b2 = lin(ks[2], ks[3], hidden_size, hidden_size // 2)
    w3, b3 = lin(ks[4], ks[5], hidden_size // 2, output_size)
    return w1, b1, w2, b2, w3, b3


def mlp_reference(x, w1, b1, w2, b2, w3, b3, matmul_dtype=jnp.float32):
    c = lambda a: a.astype(matmul_dtype)
    h1 = jnp.maximum(jnp.dot(c(x), c(w1), preferred_element_type=jnp.float32) + b1, 0.0)
    h2 = jnp.maximum(jnp.dot(c(h1), c(w2), preferred_element_type=jnp.float32) + b2, 0.0)
    return jnp.dot(c(h2), c(w3), preferred_element_type=jnp.float32) + b3


if __name__ == "__main__":
    # Small shapes consistent with the module.  B=256 -> bt=128 -> 2-step "parallel" grid
    # (exercises megacore sharding on v7x) while staying tiny.
    # NOTE: at these dims (in=16, hid=32) the MXU is heavily underfilled; the fused kernel's
    # win is removing XLA op overhead.  For production, benchmark against plain jnp/XLA.
    batch_size, input_size, hidden_size, output_size = 256, 16, 32, 1

    key = jax.random.PRNGKey(0)
    k_x, k_p = jax.random.split(key)

    x = jax.random.normal(k_x, (batch_size, input_size), jnp.float32)
    params = init_params(k_p, input_size, hidden_size, output_size)

    prepared = prepare_params(*params, matmul_dtype=jnp.bfloat16)  # one-time cast

    out = mlp_forward(x, prepared)
    out = jax.block_until_ready(out)
    assert out.shape == (batch_size, output_size)

    # Tight check vs a reference using the same bf16 matmul inputs / f32 accumulation.
    ref_bf16 = mlp_reference(x, *params, matmul_dtype=jnp.bfloat16)
    assert jnp.allclose(out, ref_bf16, atol=1e-3, rtol=1e-3), "mismatch vs bf16 reference"

    # Loose sanity check vs the pure-f32 PyTorch-equivalent math (bf16 rounding error).
    ref_f32 = mlp_reference(x, *params, matmul_dtype=jnp.float32)
    assert jnp.allclose(out, ref_f32, atol=5e-2, rtol=5e-2), "mismatch vs f32 reference"

    print("KERNEL_OK")
</pallas_src>

<mosaic_0001>
module attributes {stable_mosaic.version = 11 : i64} {
  func.func @_mlp_kernel(%arg0: i32, %arg1: memref<128x16xf32, #tpu.memory_space<vmem>>, %arg2: memref<16x32xbf16, #tpu.memory_space<vmem>>, %arg3: memref<1x32xf32, #tpu.memory_space<vmem>>, %arg4: memref<32x16xbf16, #tpu.memory_space<vmem>>, %arg5: memref<1x16xf32, #tpu.memory_space<vmem>>, %arg6: memref<16x1xbf16, #tpu.memory_space<vmem>>, %arg7: memref<1x1xf32, #tpu.memory_space<vmem>>, %arg8: memref<128x1xf32, #tpu.memory_space<vmem>>) attributes {dimension_semantics = [#tpu.dimension_semantics<parallel>], iteration_bounds = array<i64: 2>, scalar_prefetch = 0 : i64, scratch_operands = 0 : i64, tpu.core_type = #tpu.core_type<tc>, window_params = [{transform_indices = @transform_0, window_bounds = array<i64: 128, 16>}, {pipeline_mode = #tpu.pipeline_mode<synchronous>, transform_indices = @transform_1, window_bounds = array<i64: 16, 32>}, {pipeline_mode = #tpu.pipeline_mode<synchronous>, transform_indices = @transform_2, window_bounds = array<i64: 1, 32>}, {pipeline_mode = #tpu.pipeline_mode<synchronous>, transform_indices = @transform_3, window_bounds = array<i64: 32, 16>}, {pipeline_mode = #tpu.pipeline_mode<synchronous>, transform_indices = @transform_4, window_bounds = array<i64: 1, 16>}, {pipeline_mode = #tpu.pipeline_mode<synchronous>, transform_indices = @transform_5, window_bounds = array<i64: 16, 1>}, {pipeline_mode = #tpu.pipeline_mode<synchronous>, transform_indices = @transform_6, window_bounds = array<i64: 1, 1>}, {transform_indices = @transform_7, window_bounds = array<i64: 128, 1>}]} {
    %c0 = arith.constant 0 : index
    %c0_0 = arith.constant 0 : index
    %0 = vector.load %arg1[%c0, %c0_0] : memref<128x16xf32, #tpu.memory_space<vmem>>, vector<128x16xf32>
    %1 = arith.truncf %0 : vector<128x16xf32> to vector<128x16xbf16>
    %c0_1 = arith.constant 0 : index
    %c0_2 = arith.constant 0 : index
    %2 = vector.load %arg2[%c0_1, %c0_2] : memref<16x32xbf16, #tpu.memory_space<vmem>>, vector<16x32xbf16>
    %cst = arith.constant dense<0.000000e+00> : vector<128x32xf32>
    %3 = tpu.matmul %1, %2, %cst {dimension_numbers = #tpu.dot_dimension_numbers<[1], [0], [0], [1], [0, 0, 1, 1], [], []>} : vector<128x16xbf16>, vector<16x32xbf16>, vector<128x32xf32> -> vector<128x32xf32>
    %c0_3 = arith.constant 0 : index
    %c0_4 = arith.constant 0 : index
    %4 = vector.load %arg3[%c0_3, %c0_4] : memref<1x32xf32, #tpu.memory_space<vmem>>, vector<1x32xf32>
    %5 = vector.broadcast %4 : vector<1x32xf32> to vector<128x32xf32>
    %6 = arith.addf %3, %5 : vector<128x32xf32>
    %cst_5 = arith.constant 0.000000e+00 : f32
    %7 = vector.broadcast %cst_5 : f32 to vector<128x32xf32>
    %8 = arith.maximumf %6, %7 : vector<128x32xf32>
    %9 = arith.truncf %8 : vector<128x32xf32> to vector<128x32xbf16>
    %c0_6 = arith.constant 0 : index
    %c0_7 = arith.constant 0 : index
    %10 = vector.load %arg4[%c0_6, %c0_7] : memref<32x16xbf16, #tpu.memory_space<vmem>>, vector<32x16xbf16>
    %cst_8 = arith.constant dense<0.000000e+00> : vector<128x16xf32>
    %11 = tpu.matmul %9, %10, %cst_8 {dimension_numbers = #tpu.dot_dimension_numbers<[1], [0], [0], [1], [0, 0, 1, 1], [], []>} : vector<128x32xbf16>, vector<32x16xbf16>, vector<128x16xf32> -> vector<128x16xf32>
    %c0_9 = arith.constant 0 : index
    %c0_10 = arith.constant 0 : index
    %12 = vector.load %arg5[%c0_9, %c0_10] : memref<1x16xf32, #tpu.memory_space<vmem>>, vector<1x16xf32>
    %13 = vector.broadcast %12 : vector<1x16xf32> to vector<128x16xf32>
    %14 = arith.addf %11, %13 : vector<128x16xf32>
    %cst_11 = arith.constant 0.000000e+00 : f32
    %15 = vector.broadcast %cst_11 : f32 to vector<128x16xf32>
    %16 = arith.maximumf %14, %15 : vector<128x16xf32>
    %17 = arith.truncf %16 : vector<128x16xf32> to vector<128x16xbf16>
    %c0_12 = arith.constant 0 : index
    %c0_13 = arith.constant 0 : index
    %18 = vector.load %arg6[%c0_12, %c0_13] : memref<16x1xbf16, #tpu.memory_space<vmem>>, vector<16x1xbf16>
    %cst_14 = arith.constant dense<0.000000e+00> : vector<128x1xf32>
    %19 = tpu.matmul %17, %18, %cst_14 {dimension_numbers = #tpu.dot_dimension_numbers<[1], [0], [0], [1], [0, 0, 1, 1], [], []>} : vector<128x16xbf16>, vector<16x1xbf16>, vector<128x1xf32> -> vector<128x1xf32>
    %c0_15 = arith.constant 0 : index
    %c0_16 = arith.constant 0 : index
    %20 = vector.load %arg7[%c0_15, %c0_16] : memref<1x1xf32, #tpu.memory_space<vmem>>, vector<1x1xf32>
    %21 = vector.broadcast %20 : vector<1x1xf32> to vector<128x1xf32>
    %22 = arith.addf %19, %21 : vector<128x1xf32>
    %c0_17 = arith.constant 0 : index
    %c0_18 = arith.constant 0 : index
    %23 = vector.load %arg8[%c0_17, %c0_18] : memref<128x1xf32, #tpu.memory_space<vmem>>, vector<128x1xf32>
    tpu.vector_store %arg8[%c0_17, %c0_18], %22 {strides = array<i32>} : memref<128x1xf32, #tpu.memory_space<vmem>>, vector<128x1xf32>,
    return
  }
  func.func @transform_0(%arg0: i32) -> (i32, i32) {
    %c0_i32 = arith.constant 0 : i32
    %c0_i32_0 = arith.constant 0 : i32
    return %arg0, %c0_i32 : i32, i32
  }
  func.func @transform_1(%arg0: i32) -> (i32, i32) {
    %c0_i32 = arith.constant 0 : i32
    %c0_i32_0 = arith.constant 0 : i32
    %c0_i32_1 = arith.constant 0 : i32
    return %c0_i32, %c0_i32_0 : i32, i32
  }
  func.func @transform_2(%arg0: i32) -> (i32, i32) {
    %c0_i32 = arith.constant 0 : i32
    %c0_i32_0 = arith.constant 0 : i32
    %c0_i32_1 = arith.constant 0 : i32
    return %c0_i32, %c0_i32_0 : i32, i32
  }
  func.func @transform_3(%arg0: i32) -> (i32, i32) {
    %c0_i32 = arith.constant 0 : i32
    %c0_i32_0 = arith.constant 0 : i32
    %c0_i32_1 = arith.constant 0 : i32
    return %c0_i32, %c0_i32_0 : i32, i32
  }
  func.func @transform_4(%arg0: i32) -> (i32, i32) {
    %c0_i32 = arith.constant 0 : i32
    %c0_i32_0 = arith.constant 0 : i32
    %c0_i32_1 = arith.constant 0 : i32
    return %c0_i32, %c0_i32_0 : i32, i32
  }
  func.func @transform_5(%arg0: i32) -> (i32, i32) {
    %c0_i32 = arith.constant 0 : i32
    %c0_i32_0 = arith.constant 0 : i32
    %c0_i32_1 = arith.constant 0 : i32
    return %c0_i32, %c0_i32_0 : i32, i32
  }
  func.func @transform_6(%arg0: i32) -> (i32, i32) {
    %c0_i32 = arith.constant 0 : i32
    %c0_i32_0 = arith.constant 0 : i32
    %c0_i32_1 = arith.constant 0 : i32
    return %c0_i32, %c0_i32_0 : i32, i32
  }
  func.func @transform_7(%arg0: i32) -> (i32, i32) {
    %c0_i32 = arith.constant 0 : i32
    %c0_i32_0 = arith.constant 0 : i32
    return %arg0, %c0_i32 : i32, i32
  }
}

</mosaic_0001>

<llo_original>
// kernel: _mlp_forward_impl.1
$region0: #{_mlp_forward_impl.1}
  #allocation0 [shape = 'u32[]', space=smem, size = 0x4, offset = 0x4, fixed_abs, tag = 'smem constant byte address 0x4 - core index']
  #allocation1 [shape = 'u32[144,128]{1,0:T(1,128)}', space=vmem, size = 0x12000, scoped, tag = 'internal scratch']
  #allocation2 [shape = 'f32[1,1]{1,0:T(1,128)S(1)}', space=vmem, size = 0x200, scoped, tag = 'scoped memory for _mlp_forward_impl.1']
  %s0 = inlined_call_operand.vmem [shape: f32[256,16], index: 0, kind: input, shape index: {}]
  %s1 = inlined_call_operand.vmem [shape: bf16[16,32], index: 1, kind: input, shape index: {}]
  %s2 = inlined_call_operand.vmem [shape: f32[1,32], index: 2, kind: input, shape index: {}]
  %s3 = inlined_call_operand.vmem [shape: bf16[32,16], index: 3, kind: input, shape index: {}]
  %s4 = inlined_call_operand.vmem [shape: f32[1,16], index: 4, kind: input, shape index: {}]
  %s5 = inlined_call_operand.vmem [shape: bf16[16,1], index: 5, kind: input, shape index: {}]
  %s6 = inlined_call_operand.<no memory space> [shape: f32[1,1], index: 6, kind: input, shape index: {}]
  %s7 = inlined_call_operand.vmem [shape: f32[256,1], index: 7, kind: output, shape index: {}]
  %s8 = sld [smem:[#allocation0]]
  $region61: #{_mlp_forward_impl.1} parent=0
    _
  %s10 = ssub.s32 1, %s8
  %s11 = scalar_select 0, %s10, %s8
  %v12 = vstv %s6
  %13 = vst [vmem:[#allocation2] sm:$0x1] %v12
  loop: start=0, step=1, limit=4
  $region2: #{_mlp_forward_impl.1} parent=0 // loop_pre_header
    _
  $region3: #{_mlp_forward_impl.1} parent=0 // loop_header
    %s15 = sphi 0, %s19
    %p16 = scmp.ge.s32.totalorder %s15, 4
    %s25 = sphi 0, %s27
    %s28 = sphi 0, %s25
    %s29 = sphi 0, %s28
    %s45 = sphi 0, %s29
    %s49 = sphi 0, %s49
    %s51 = sphi 0, %s49
    %s52 = sphi 0, %s51
    %s66 = sphi 0, %s52
    %s70 = sphi 0, %s70
    %s72 = sphi 0, %s70
    %s73 = sphi 0, %s72
    %s87 = sphi 0, %s73
    %s91 = sphi 0, %s91
    %s93 = sphi 0, %s91
    %s94 = sphi 0, %s93
    %s108 = sphi 0, %s94
    %s112 = sphi 0, %s112
    %s114 = sphi 0, %s112
    %s115 = sphi 0, %s114
    %s129 = sphi 0, %s115
    %s133 = sphi 0, %s133
    %s135 = sphi 0, %s133
    %s136 = sphi 0, %s135
    %s150 = sphi 0, %s136
    %s154 = sphi 0, %s154
    %s156 = sphi 0, %s154
    %s157 = sphi 0, %s156
    %s171 = sphi 0, %s157
    %s177 = sphi 0, %s179
    %s180 = sphi 0, %s177
    %s181 = sphi 0, %s180
    %s197 = sphi 0, %s181
  $region4: #{_mlp_forward_impl.1} parent=0 // loop_header_branch
    %18 = sbr.rel (%p16) target = $region8
  $region5: #{_mlp_forward_impl.1} parent=0 // loop_body
    %s20 = ssub.s32 %s15, 1
    %s21 = ssub.s32 %s15, 2
    %s22 = sadd.s32 %s15, 1
    %s23 = ssub.s32 %s15, %s22
    %p24 = scmp.eq.s32.totalorder %s23, 0
    %s26 = sadd.s32 %s25, 1
    %s27 = scalar_select %p24, %s25, %s26
    %p30 = pneg %p24
    %p31 = scmp.eq.s32.totalorder %s15, 1
    %p32 = por %p30, %p31
    %p33 = scmp.ne.s32.totalorder %s25, %s28
    %p34 = scmp.eq.s32.totalorder %s15, 0
    %p35 = por %p33, %p34
    %p36 = scmp.ne.s32.totalorder %s25, %s28
    %p37 = scmp.eq.s32.totalorder %s20, 1
    %p38 = por %p36, %p37
    %p39 = scmp.ne.s32.totalorder %s28, %s29
    %p40 = scmp.eq.s32.totalorder %s20, 0
    %p41 = por %p39, %p40
    %p42 = scmp.ne.s32.totalorder %s28, %s29
    %p43 = scmp.eq.s32.totalorder %s21, 1
    %p44 = por %p42, %p43
    %p46 = scmp.ne.s32.totalorder %s29, %s45
    %p47 = scmp.eq.s32.totalorder %s21, 0
    %p48 = por %p46, %p47
    %s50 = sadd.s32 %s49, 1
    %p53 = scmp.eq.s32.totalorder %s15, 1
    %p54 = scmp.ne.s32.totalorder %s49, %s51
    %p55 = scmp.eq.s32.totalorder %s15, 0
    %p56 = por %p54, %p55
    %p57 = scmp.ne.s32.totalorder %s49, %s51
    %p58 = scmp.eq.s32.totalorder %s20, 1
    %p59 = por %p57, %p58
    %p60 = scmp.ne.s32.totalorder %s51, %s52
    %p61 = scmp.eq.s32.totalorder %s20, 0
    %p62 = por %p60, %p61
    %p63 = scmp.ne.s32.totalorder %s51, %s52
    %p64 = scmp.eq.s32.totalorder %s21, 1
    %p65 = por %p63, %p64
    %p67 = scmp.ne.s32.totalorder %s52, %s66
    %p68 = scmp.eq.s32.totalorder %s21, 0
    %p69 = por %p67, %p68
    %s71 = sadd.s32 %s70, 1
    %p74 = scmp.eq.s32.totalorder %s15, 1
    %p75 = scmp.ne.s32.totalorder %s70, %s72
    %p76 = scmp.eq.s32.totalorder %s15, 0
    %p77 = por %p75, %p76
    %p78 = scmp.ne.s32.totalorder %s70, %s72
    %p79 = scmp.eq.s32.totalorder %s20, 1
    %p80 = por %p78, %p79
    %p81 = scmp.ne.s32.totalorder %s72, %s73
    %p82 = scmp.eq.s32.totalorder %s20, 0
    %p83 = por %p81, %p82
    %p84 = scmp.ne.s32.totalorder %s72, %s73
    %p85 = scmp.eq.s32.totalorder %s21, 1
    %p86 = por %p84, %p85
    %p88 = scmp.ne.s32.totalorder %s73, %s87
    %p89 = scmp.eq.s32.totalorder %s21, 0
    %p90 = por %p88, %p89
    %s92 = sadd.s32 %s91, 1
    %p95 = scmp.eq.s32.totalorder %s15, 1
    %p96 = scmp.ne.s32.totalorder %s91, %s93
    %p97 = scmp.eq.s32.totalorder %s15, 0
    %p98 = por %p96, %p97
    %p99 = scmp.ne.s32.totalorder %s91, %s93
    %p100 = scmp.eq.s32.totalorder %s20, 1
    %p101 = por %p99, %p100
    %p102 = scmp.ne.s32.totalorder %s93, %s94
    %p103 = scmp.eq.s32.totalorder %s20, 0
    %p104 = por %p102, %p103
    %p105 = scmp.ne.s32.totalorder %s93, %s94
    %p106 = scmp.eq.s32.totalorder %s21, 1
    %p107 = por %p105, %p106
    %p109 = scmp.ne.s32.totalorder %s94, %s108
    %p110 = scmp.eq.s32.totalorder %s21, 0
    %p111 = por %p109, %p110
    %s113 = sadd.s32 %s112, 1
    %p116 = scmp.eq.s32.totalorder %s15, 1
    %p117 = scmp.ne.s32.totalorder %s112, %s114
    %p118 = scmp.eq.s32.totalorder %s15, 0
    %p119 = por %p117, %p118
    %p120 = scmp.ne.s32.totalorder %s112, %s114
    %p121 = scmp.eq.s32.totalorder %s20, 1
    %p122 = por %p120, %p121
    %p123 = scmp.ne.s32.totalorder %s114, %s115
    %p124 = scmp.eq.s32.totalorder %s20, 0
    %p125 = por %p123, %p124
    %p126 = scmp.ne.s32.totalorder %s114, %s115
    %p127 = scmp.eq.s32.totalorder %s21, 1
    %p128 = por %p126, %p127
    %p130 = scmp.ne.s32.totalorder %s115, %s129
    %p131 = scmp.eq.s32.totalorder %s21, 0
    %p132 = por %p130, %p131
    %s134 = sadd.s32 %s133, 1
    %p137 = scmp.eq.s32.totalorder %s15, 1
    %p138 = scmp.ne.s32.totalorder %s133, %s135
    %p139 = scmp.eq.s32.totalorder %s15, 0
    %p140 = por %p138, %p139
    %p141 = scmp.ne.s32.totalorder %s133, %s135
    %p142 = scmp.eq.s32.totalorder %s20, 1
    %p143 = por %p141, %p142
    %p144 = scmp.ne.s32.totalorder %s135, %s136
    %p145 = scmp.eq.s32.totalorder %s20, 0
    %p146 = por %p144, %p145
    %p147 = scmp.ne.s32.totalorder %s135, %s136
    %p148 = scmp.eq.s32.totalorder %s21, 1
    %p149 = por %p147, %p148
    %p151 = scmp.ne.s32.totalorder %s136, %s150
    %p152 = scmp.eq.s32.totalorder %s21, 0
    %p153 = por %p151, %p152
    %s155 = sadd.s32 %s154, 1
    %p158 = scmp.eq.s32.totalorder %s15, 1
    %p159 = scmp.ne.s32.totalorder %s154, %s156
    %p160 = scmp.eq.s32.totalorder %s15, 0
    %p161 = por %p159, %p160
    %p162 = scmp.ne.s32.totalorder %s154, %s156
    %p163 = scmp.eq.s32.totalorder %s20, 1
    %p164 = por %p162, %p163
    %p165 = scmp.ne.s32.totalorder %s156, %s157
    %p166 = scmp.eq.s32.totalorder %s20, 0
    %p167 = por %p165, %p166
    %p168 = scmp.ne.s32.totalorder %s156, %s157
    %p169 = scmp.eq.s32.totalorder %s21, 1
    %p170 = por %p168, %p169
    %p172 = scmp.ne.s32.totalorder %s157, %s171
    %p173 = scmp.eq.s32.totalorder %s21, 0
    %p174 = por %p172, %p173
    %s175 = ssub.s32 %s15, %s22
    %p176 = scmp.eq.s32.totalorder %s175, 0
    %s178 = sadd.s32 %s177, 1
    %s179 = scalar_select %p176, %s177, %s178
    %p182 = pneg %p176
    %p183 = scmp.eq.s32.totalorder %s15, 1
    %p184 = por %p182, %p183
    %p185 = scmp.ne.s32.totalorder %s177, %s180
    %p186 = scmp.eq.s32.totalorder %s15, 0
    %p187 = por %p185, %p186
    %p188 = scmp.ne.s32.totalorder %s177, %s180
    %p189 = scmp.eq.s32.totalorder %s20, 1
    %p190 = por %p188, %p189
    %p191 = scmp.ne.s32.totalorder %s180, %s181
    %p192 = scmp.eq.s32.totalorder %s20, 0
    %p193 = por %p191, %p192
    %p194 = scmp.ne.s32.totalorder %s180, %s181
    %p195 = scmp.eq.s32.totalorder %s21, 1
    %p196 = por %p194, %p195
    %p198 = scmp.ne.s32.totalorder %s181, %s197
    %p199 = scmp.eq.s32.totalorder %s21, 0
    %p200 = por %p198, %p199
    %p201 = scmp.le.s32.totalorder 1, %s15
    %p202 = scmp.lt.s32.totalorder %s15, 3
    %p203 = pnand %p201, %p202
    %p204 = pneg %p203
    // Predicated region
    $region9: #{_mlp_forward_impl.1} parent=5 // pred_check
      _
    $region10: #{_mlp_forward_impl.1} parent=5 // pred_check_branch
      %206 = sbr.rel (%p203) target = $region12
    $region11: #{_mlp_forward_impl.1} parent=5 // pred_region
      %s207 = ssub.s32 %s15, 1
      // Predicated region
      $region13: #{_mlp_forward_impl.1} parent=11 // pred_check
        %p208 = pneg %p62
      $region14: #{_mlp_forward_impl.1} parent=11 // pred_check_branch
        %210 = sbr.rel (%p208) target = $region16
      $region15: #{_mlp_forward_impl.1} parent=11 // pred_region
        _
      $region16: #{_mlp_forward_impl.1} parent=11 // pred_fallthru
        _
      // Predicated region
      $region17: #{_mlp_forward_impl.1} parent=11 // pred_check
        %p211 = pneg %p83
      $region18: #{_mlp_forward_impl.1} parent=11 // pred_check_branch
        %213 = sbr.rel (%p211) target = $region20
      $region19: #{_mlp_forward_impl.1} parent=11 // pred_region
        _
      $region20: #{_mlp_forward_impl.1} parent=11 // pred_fallthru
        _
      // Predicated region
      $region21: #{_mlp_forward_impl.1} parent=11 // pred_check
        %p214 = pneg %p104
      $region22: #{_mlp_forward_impl.1} parent=11 // pred_check_branch
        %216 = sbr.rel (%p214) target = $region24
      $region23: #{_mlp_forward_impl.1} parent=11 // pred_region
        _
      $region24: #{_mlp_forward_impl.1} parent=11 // pred_fallthru
        _
      // Predicated region
      $region25: #{_mlp_forward_impl.1} parent=11 // pred_check
        %p217 = pneg %p125
      $region26: #{_mlp_forward_impl.1} parent=11 // pred_check_branch
        %219 = sbr.rel (%p217) target = $region28
      $region27: #{_mlp_forward_impl.1} parent=11 // pred_region
        _
      $region28: #{_mlp_forward_impl.1} parent=11 // pred_fallthru
        _
      // Predicated region
      $region29: #{_mlp_forward_impl.1} parent=11 // pred_check
        %p220 = pneg %p146
      $region30: #{_mlp_forward_impl.1} parent=11 // pred_check_branch
        %222 = sbr.rel (%p220) target = $region32
      $region31: #{_mlp_forward_impl.1} parent=11 // pred_region
        _
      $region32: #{_mlp_forward_impl.1} parent=11 // pred_fallthru
        _
      // Predicated region
      $region33: #{_mlp_forward_impl.1} parent=11 // pred_check
        %p223 = pneg %p167
      $region34: #{_mlp_forward_impl.1} parent=11 // pred_check_branch
        %225 = sbr.rel (%p223) target = $region36
      $region35: #{_mlp_forward_impl.1} parent=11 // pred_region
        _
      $region36: #{_mlp_forward_impl.1} parent=11 // pred_fallthru
        _
    $region12: #{_mlp_forward_impl.1} parent=5 // pred_fallthru
      _
    %p226 = scmp.lt.s32.totalorder %s15, 2
    // Predicated region
    $region37: #{_mlp_forward_impl.1} parent=5 // pred_check
      %p227 = pneg %p226
    $region38: #{_mlp_forward_impl.1} parent=5 // pred_check_branch
      %229 = sbr.rel (%p227) target = $region40
    $region39: #{_mlp_forward_impl.1} parent=5 // pred_region
      // Predicated region
      $region41: #{_mlp_forward_impl.1} parent=39 // pred_check
        %p230 = pneg %p35
      $region42: #{_mlp_forward_impl.1} parent=39 // pred_check_branch
        %232 = sbr.rel (%p230) target = $region44
      $region43: #{_mlp_forward_impl.1} parent=39 // pred_region
        %s233 = smul.u32 16, %s15
        %p234 = scmp.lt.s32.totalorder %s233, 31
        %s235 = scalar_select %p234, %s233, 31
        %s236 = smul.addr %s235, 8
        %s237 = scalar_lea.vmem %s0, %s236
        %s238 = smul.u32 16, %s15
      $region44: #{_mlp_forward_impl.1} parent=39 // pred_fallthru
        _
    $region40: #{_mlp_forward_impl.1} parent=5 // pred_fallthru
      _
    %p239 = scmp.le.s32.totalorder 1, %s15
    %p240 = scmp.lt.s32.totalorder %s15, 3
    %p241 = pnand %p239, %p240
    %p242 = pneg %p241
    // Predicated region
    $region45: #{_mlp_forward_impl.1} parent=5 // pred_check
      _
    $region46: #{_mlp_forward_impl.1} parent=5 // pred_check_branch
      %244 = sbr.rel (%p241) target = $region48
    $region47: #{_mlp_forward_impl.1} parent=5 // pred_region
      %s245 = ssub.s32 %s15, 1
      %s246 = smul.u32 16, %s20
      %p247 = scmp.lt.s32.totalorder %s246, 31
      %s248 = scalar_select %p247, %s246, 31
      %s249 = smul.addr %s248, 8
      %s250 = scalar_lea.vmem %s0, %s249
      %p251 = pneg %p41
      %p252 = pneg %p38
      %p253 = pneg %p62
      %p254 = pneg %p59
      %p255 = pneg %p83
      %p256 = pneg %p80
      %p257 = pneg %p104
      %p258 = pneg %p101
      %p259 = pneg %p125
      %p260 = pneg %p122
      %p261 = pneg %p146
      %p262 = pneg %p143
      %p263 = pneg %p167
      %p264 = pneg %p164
      %p265 = pneg %p193
      %p266 = pneg %p190
      %s267 = smul.u32 16, %s20
      %p268 = scmp.lt.s32.totalorder %s267, 31
      %s269 = scalar_select %p268, %s267, 31
      %s270 = smul.addr %s269, 8
      %s271 = scalar_lea.vmem %s7, %s270
      %s272 = smul.u32 16, %s20
      %p273 = scmp.lt.s32.totalorder %s272, 31
      %s274 = scalar_select %p273, %s272, 31
      %s275 = smul.addr %s274, 8
      %s276 = scalar_lea.vmem %s0, %s275
      %s277 = smul.u32 16, %s20
      %s278 = smul.u32 16, %s20
      %p279 = scmp.lt.s32.totalorder %s278, 31
      %s280 = scalar_select %p279, %s278, 31
      %s281 = smul.addr %s280, 8
      %s282 = scalar_lea.vmem %s7, %s281
      %s283 = smul.u32 16, %s20
      %v285 = vld [vmem:[%s276] sm:$0xff]
      %v286 = vld [vmem:[%s276 + $0x8] sm:$0xff]
      %v287 = vld [vmem:[%s276 + $0x10] sm:$0xff]
      %v288 = vld [vmem:[%s276 + $0x18] sm:$0xff]
      %v289 = vld [vmem:[%s276 + $0x20] sm:$0xff]
      %v290 = vld [vmem:[%s276 + $0x28] sm:$0xff]
      %v291 = vld [vmem:[%s276 + $0x30] sm:$0xff]
      %v292 = vld [vmem:[%s276 + $0x38] sm:$0xff]
      %v293 = vld [vmem:[%s276 + $0x40] sm:$0xff]
      %v294 = vld [vmem:[%s276 + $0x48] sm:$0xff]
      %v295 = vld [vmem:[%s276 + $0x50] sm:$0xff]
      %v296 = vld [vmem:[%s276 + $0x58] sm:$0xff]
      %v297 = vld [vmem:[%s276 + $0x60] sm:$0xff]
      %v298 = vld [vmem:[%s276 + $0x68] sm:$0xff]
      %v299 = vld [vmem:[%s276 + $0x70] sm:$0xff]
      %v300 = vld [vmem:[%s276 + $0x78] sm:$0xff]
      %v301 = vpack.c.bf16 %v286, %v285
      %v302 = vpack.c.bf16 %v288, %v287
      %v303 = vpack.c.bf16 %v290, %v289
      %v304 = vpack.c.bf16 %v292, %v291
      %v305 = vpack.c.bf16 %v294, %v293
      %v306 = vpack.c.bf16 %v296, %v295
      %v307 = vpack.c.bf16 %v298, %v297
      %v308 = vpack.c.bf16 %v300, %v299
      %v309 = vld [vmem:[%s1] sm:$0xf]
      %v310 = vld [vmem:[%s1 + $0x4] sm:$0xf]
      %v311 = vld [vmem:[%s2] sm:$0x1]
      %v313 = vlaneseq
      %v314 = vshrl.u32 %v313, 7
      %v315 = vsub.s32 0, %v314
      %v316 = vrot.slane %v311, %v315
      %v320 = vunpack.c.l.b16 %v309
      %v321 = vunpack.c.l.b16 %v310
      %v322 = vpack.c.b16 %v321, %v320
      %vm324 = vcmask 130048
      %v326 = vsel %vm324, %v301, 0
      %v329 = vsel %vm324, %v302, 0
      %v332 = vsel %vm324, %v303, 0
      %v335 = vsel %vm324, %v304, 0
      %v338 = vsel %vm324, %v305, 0
      %v341 = vsel %vm324, %v306, 0
      %v344 = vsel %vm324, %v307, 0
      %v347 = vsel %vm324, %v308, 0
      %349 = vmatprep.subr.bf16.mxu0 0
      %350 = vmatpush1.bf16.msra.mxu0 %v322
      %351 = vmatprep.subr.bf16.mxu0 0
      %352 = vmatpush1.bf16.msra.mxu0 0
      %353 = vmatprep.subr.bf16.mxu0 0
      %354 = vmatpush1.bf16.msra.mxu0 0
      %355 = vmatprep.subr.bf16.mxu0 0
      %356 = vmatpush1.bf16.msra.mxu0 0
      %357 = vmatprep.subr.bf16.mxu0 0
      %358 = vmatpush1.bf16.msra.mxu0 0
      %359 = vmatprep.subr.bf16.mxu0 0
      %360 = vmatpush1.bf16.msra.mxu0 0
      %361 = vmatprep.subr.bf16.mxu0 0
      %362 = vmatpush1.bf16.msra.mxu0 0
      %363 = vmatprep.subr.bf16.mxu0 0
      %364 = vmatpush1.bf16.msra.mxu0 0
      %365 = vmatprep.subr.bf16.mxu0 0
      %366 = vmatpush1.bf16.msra.mxu0 0
      %367 = vmatprep.subr.bf16.mxu0 0
      %368 = vmatpush1.bf16.msra.mxu0 0
      %369 = vmatprep.subr.bf16.mxu0 0
      %370 = vmatpush1.bf16.msra.mxu0 0
      %371 = vmatprep.subr.bf16.mxu0 0
      %372 = vmatpush1.bf16.msra.mxu0 0
      %373 = vmatprep.subr.bf16.mxu0 0
      %374 = vmatpush1.bf16.msra.mxu0 0
      %375 = vmatprep.subr.bf16.mxu0 0
      %376 = vmatpush1.bf16.msra.mxu0 0
      %377 = vmatprep.subr.bf16.mxu0 0
      %378 = vmatpush1.bf16.msra.mxu0 0
      %379 = vmatprep.subr.bf16.mxu0 0
      %380 = vmatpush1.bf16.msra.mxu0 0
      %381 = vmatprep.mubr.bf16.mxu0 0
      %382 = vmatmul.mubr.bf16.gmra.mrb[0].mxu0 %v326
      %v383 = vpop.f32.mrb[0].mxu0
      %v384 = vadd.f32 %v316, %v383
      %v385 = vpop.f32.mrb[0].mxu0
      %v386 = vpop.f32.mrb[0].mxu0
      %v387 = vadd.f32 %v316, %v386
      %v388 = vpop.f32.mrb[0].mxu0
      %389 = vmatprep.mubr.bf16.mxu0 0
      %390 = vmatmul.mubr.bf16.gmra.mrb[0].mxu0 %v329
      %v391 = vpop.f32.mrb[0].mxu0
      %v392 = vadd.f32 %v316, %v391
      %v393 = vpop.f32.mrb[0].mxu0
      %v394 = vpop.f32.mrb[0].mxu0
      %v395 = vadd.f32 %v316, %v394
      %v396 = vpop.f32.mrb[0].mxu0
      %397 = vmatprep.mubr.bf16.mxu0 0
      %398 = vmatmul.mubr.bf16.gmra.mrb[0].mxu0 %v332
      %v399 = vpop.f32.mrb[0].mxu0
      %v400 = vadd.f32 %v316, %v399
      %v401 = vpop.f32.mrb[0].mxu0
      %v402 = vpop.f32.mrb[0].mxu0
      %v403 = vadd.f32 %v316, %v402
      %v404 = vpop.f32.mrb[0].mxu0
      %405 = vmatprep.mubr.bf16.mxu0 0
      %406 = vmatmul.mubr.bf16.gmra.mrb[0].mxu0 %v335
      %v407 = vpop.f32.mrb[0].mxu0
      %v408 = vadd.f32 %v316, %v407
      %v409 = vpop.f32.mrb[0].mxu0
      %v410 = vpop.f32.mrb[0].mxu0
      %v411 = vadd.f32 %v316, %v410
      %v412 = vpop.f32.mrb[0].mxu0
      %413 = vmatprep.mubr.bf16.mxu0 0
      %414 = vmatmul.mubr.bf16.gmra.mrb[0].mxu0 %v338
      %v415 = vpop.f32.mrb[0].mxu0
      %v416 = vadd.f32 %v316, %v415
      %v417 = vpop.f32.mrb[0].mxu0
      %v418 = vpop.f32.mrb[0].mxu0
      %v419 = vadd.f32 %v316, %v418
      %v420 = vpop.f32.mrb[0].mxu0
      %421 = vmatprep.mubr.bf16.mxu0 0
      %422 = vmatmul.mubr.bf16.gmra.mrb[0].mxu0 %v341
      %v423 = vpop.f32.mrb[0].mxu0
      %v424 = vadd.f32 %v316, %v423
      %v425 = vpop.f32.mrb[0].mxu0
      %v426 = vpop.f32.mrb[0].mxu0
      %v427 = vadd.f32 %v316, %v426
      %v428 = vpop.f32.mrb[0].mxu0
      %429 = vmatprep.mubr.bf16.mxu0 0
      %430 = vmatmul.mubr.bf16.gmra.mrb[0].mxu0 %v344
      %v431 = vpop.f32.mrb[0].mxu0
      %v432 = vadd.f32 %v316, %v431
      %v433 = vpop.f32.mrb[0].mxu0
      %v434 = vpop.f32.mrb[0].mxu0
      %v435 = vadd.f32 %v316, %v434
      %v436 = vpop.f32.mrb[0].mxu0
      %437 = vmatprep.mubr.bf16.mxu0 0
      %438 = vmatmul.mubr.bf16.gmra.mrb[0].mxu0 %v347
      %v439 = vpop.f32.mrb[0].mxu0
      %v440 = vadd.f32 %v316, %v439
      %v441 = vpop.f32.mrb[0].mxu0
      %v442 = vpop.f32.mrb[0].mxu0
      %v443 = vadd.f32 %v316, %v442
      %v444 = vpop.f32.mrb[0].mxu0
      %445 = vdwg.mxu0
      %v446 = vmax.f32 %v384, 0.0
      %v447 = vmax.f32 %v387, 0.0
      %v448 = vmax.f32 %v392, 0.0
      %v449 = vmax.f32 %v395, 0.0
      %v450 = vmax.f32 %v400, 0.0
      %v451 = vmax.f32 %v403, 0.0
      %v452 = vmax.f32 %v408, 0.0
      %v453 = vmax.f32 %v411, 0.0
      %v454 = vmax.f32 %v416, 0.0
      %v455 = vmax.f32 %v419, 0.0
      %v456 = vmax.f32 %v424, 0.0
      %v457 = vmax.f32 %v427, 0.0
      %v458 = vmax.f32 %v432, 0.0
      %v459 = vmax.f32 %v435, 0.0
      %v460 = vmax.f32 %v440, 0.0
      %v461 = vmax.f32 %v443, 0.0
      %v462 = vpack.c.bf16 %v447, %v446
      %v463 = vpack.c.bf16 %v449, %v448
      %v464 = vpack.c.bf16 %v451, %v450
      %v465 = vpack.c.bf16 %v453, %v452
      %v466 = vpack.c.bf16 %v455, %v454
      %v467 = vpack.c.bf16 %v457, %v456
      %v468 = vpack.c.bf16 %v459, %v458
      %v469 = vpack.c.bf16 %v461, %v460
      %v470 = vld [vmem:[%s3] sm:$0xf]
      %v471 = vld [vmem:[%s3 + $0x4] sm:$0xf]
      %v472 = vld [vmem:[%s3 + $0x8] sm:$0xf]
      %v473 = vld [vmem:[%s3 + $0xc] sm:$0xf]
      %v474 = vld [vmem:[%s4] sm:$0x1]
      %v476 = vlaneseq
      %v477 = vshrl.u32 %v476, 7
      %v478 = vsub.s32 0, %v477
      %v479 = vrot.slane %v474, %v478
      %v485 = vunpack.c.l.b16 %v470
      %v486 = vunpack.c.l.b16 %v471
      %v487 = vunpack.c.l.b16 %v472
      %v488 = vunpack.c.l.b16 %v473
      %v489 = vpack.c.b16 %v486, %v485
      %v490 = vpack.c.b16 %v488, %v487
      %vm493 = vcmask 261120
      %v495 = vsel %vm493, %v462, 0
      %v498 = vsel %vm493, %v463, 0
      %v501 = vsel %vm493, %v464, 0
      %v504 = vsel %vm493, %v465, 0
      %v507 = vsel %vm493, %v466, 0
      %v510 = vsel %vm493, %v467, 0
      %v513 = vsel %vm493, %v468, 0
      %v516 = vsel %vm493, %v469, 0
      %518 = vmatprep.subr.bf16.mxu0 0
      %519 = vmatpush1.bf16.msra.mxu0 %v489
      %520 = vmatprep.subr.bf16.mxu0 0
      %521 = vmatpush1.bf16.msra.mxu0 %v490
      %522 = vmatprep.subr.bf16.mxu0 0
      %523 = vmatpush1.bf16.msra.mxu0 0
      %524 = vmatprep.subr.bf16.mxu0 0
      %525 = vmatpush1.bf16.msra.mxu0 0
      %526 = vmatprep.subr.bf16.mxu0 0
      %527 = vmatpush1.bf16.msra.mxu0 0
      %528 = vmatprep.subr.bf16.mxu0 0
      %529 = vmatpush1.bf16.msra.mxu0 0
      %530 = vmatprep.subr.bf16.mxu0 0
      %531 = vmatpush1.bf16.msra.mxu0 0
      %532 = vmatprep.subr.bf16.mxu0 0
      %533 = vmatpush1.bf16.msra.mxu0 0
      %534 = vmatprep.subr.bf16.mxu0 0
      %535 = vmatpush1.bf16.msra.mxu0 0
      %536 = vmatprep.subr.bf16.mxu0 0
      %537 = vmatpush1.bf16.msra.mxu0 0
      %538 = vmatprep.subr.bf16.mxu0 0
      %539 = vmatpush1.bf16.msra.mxu0 0
      %540 = vmatprep.subr.bf16.mxu0 0
      %541 = vmatpush1.bf16.msra.mxu0 0
      %542 = vmatprep.subr.bf16.mxu0 0
      %543 = vmatpush1.bf16.msra.mxu0 0
      %544 = vmatprep.subr.bf16.mxu0 0
      %545 = vmatpush1.bf16.msra.mxu0 0
      %546 = vmatprep.subr.bf16.mxu0 0
      %547 = vmatpush1.bf16.msra.mxu0 0
      %548 = vmatprep.subr.bf16.mxu0 0
      %549 = vmatpush1.bf16.msra.mxu0 0
      %550 = vmatprep.mubr.bf16.mxu0 0
      %551 = vmatmul.mubr.bf16.gmra.mrb[0].mxu0 %v495
      %v552 = vpop.f32.mrb[0].mxu0
      %v553 = vadd.f32 %v479, %v552
      %v554 = vpop.f32.mrb[0].mxu0
      %v555 = vpop.f32.mrb[0].mxu0
      %v556 = vadd.f32 %v479, %v555
      %v557 = vpop.f32.mrb[0].mxu0
      %558 = vmatprep.mubr.bf16.mxu0 0
      %559 = vmatmul.mubr.bf16.gmra.mrb[0].mxu0 %v498
      %v560 = vpop.f32.mrb[0].mxu0
      %v561 = vadd.f32 %v479, %v560
      %v562 = vpop.f32.mrb[0].mxu0
      %v563 = vpop.f32.mrb[0].mxu0
      %v564 = vadd.f32 %v479, %v563
      %v565 = vpop.f32.mrb[0].mxu0
      %566 = vmatprep.mubr.bf16.mxu0 0
      %567 = vmatmul.mubr.bf16.gmra.mrb[0].mxu0 %v501
      %v568 = vpop.f32.mrb[0].mxu0
      %v569 = vadd.f32 %v479, %v568
      %v570 = vpop.f32.mrb[0].mxu0
      %v571 = vpop.f32.mrb[0].mxu0
      %v572 = vadd.f32 %v479, %v571
      %v573 = vpop.f32.mrb[0].mxu0
      %574 = vmatprep.mubr.bf16.mxu0 0
      %575 = vmatmul.mubr.bf16.gmra.mrb[0].mxu0 %v504
      %v576 = vpop.f32.mrb[0].mxu0
      %v577 = vadd.f32 %v479, %v576
      %v578 = vpop.f32.mrb[0].mxu0
      %v579 = vpop.f32.mrb[0].mxu0
      %v580 = vadd.f32 %v479, %v579
      %v581 = vpop.f32.mrb[0].mxu0
      %582 = vmatprep.mubr.bf16.mxu0 0
      %583 = vmatmul.mubr.bf16.gmra.mrb[0].mxu0 %v507
      %v584 = vpop.f32.mrb[0].mxu0
      %v585 = vadd.f32 %v479, %v584
      %v586 = vpop.f32.mrb[0].mxu0
      %v587 = vpop.f32.mrb[0].mxu0
      %v588 = vadd.f32 %v479, %v587
      %v589 = vpop.f32.mrb[0].mxu0
      %590 = vmatprep.mubr.bf16.mxu0 0
      %591 = vmatmul.mubr.bf16.gmra.mrb[0].mxu0 %v510
      %v592 = vpop.f32.mrb[0].mxu0
      %v593 = vadd.f32 %v479, %v592
      %v594 = vpop.f32.mrb[0].mxu0
      %v595 = vpop.f32.mrb[0].mxu0
      %v596 = vadd.f32 %v479, %v595
      %v597 = vpop.f32.mrb[0].mxu0
      %598 = vmatprep.mubr.bf16.mxu0 0
      %599 = vmatmul.mubr.bf16.gmra.mrb[0].mxu0 %v513
      %v600 = vpop.f32.mrb[0].mxu0
      %v601 = vadd.f32 %v479, %v600
      %v602 = vpop.f32.mrb[0].mxu0
      %v603 = vpop.f32.mrb[0].mxu0
      %v604 = vadd.f32 %v479, %v603
      %v605 = vpop.f32.mrb[0].mxu0
      %606 = vmatprep.mubr.bf16.mxu0 0
      %607 = vmatmul.mubr.bf16.gmra.mrb[0].mxu0 %v516
      %v608 = vpop.f32.mrb[0].mxu0
      %v609 = vadd.f32 %v479, %v608
      %v610 = vpop.f32.mrb[0].mxu0
      %v611 = vpop.f32.mrb[0].mxu0
      %v612 = vadd.f32 %v479, %v611
      %v613 = vpop.f32.mrb[0].mxu0
      %614 = vdwg.mxu0
      %v615 = vmax.f32 %v553, 0.0
      %v616 = vmax.f32 %v556, 0.0
      %v617 = vmax.f32 %v561, 0.0
      %v618 = vmax.f32 %v564, 0.0
      %v619 = vmax.f32 %v569, 0.0
      %v620 = vmax.f32 %v572, 0.0
      %v621 = vmax.f32 %v577, 0.0
      %v622 = vmax.f32 %v580, 0.0
      %v623 = vmax.f32 %v585, 0.0
      %v624 = vmax.f32 %v588, 0.0
      %v625 = vmax.f32 %v593, 0.0
      %v626 = vmax.f32 %v596, 0.0
      %v627 = vmax.f32 %v601, 0.0
      %v628 = vmax.f32 %v604, 0.0
      %v629 = vmax.f32 %v609, 0.0
      %v630 = vmax.f32 %v612, 0.0
      %v631 = vpack.c.bf16 %v616, %v615
      %v632 = vpack.c.bf16 %v618, %v617
      %v633 = vpack.c.bf16 %v620, %v619
      %v634 = vpack.c.bf16 %v622, %v621
      %v635 = vpack.c.bf16 %v624, %v623
      %v636 = vpack.c.bf16 %v626, %v625
      %v637 = vpack.c.bf16 %v628, %v627
      %v638 = vpack.c.bf16 %v630, %v629
      %v639 = vld [vmem:[%s5] sm:$0xf]
      %v640 = vld [vmem:[%s5 + $0x4] sm:$0xf]
      %v641 = vld [vmem:[#allocation2] sm:$0x1]
      %v643 = vlaneseq
      %v644 = vshrl.u32 %v643, 7
      %v645 = vsub.s32 0, %v644
      %v646 = vrot.slane %v641, %v645
      %v650 = vunpack.c.l.b16 %v639
      %v651 = vunpack.c.l.b16 %v640
      %v652 = vpack.c.b16 %v651, %v650
      %v655 = vsel %vm324, %v631, 0
      %v658 = vsel %vm324, %v632, 0
      %v661 = vsel %vm324, %v633, 0
      %v664 = vsel %vm324, %v634, 0
      %v667 = vsel %vm324, %v635, 0
      %v670 = vsel %vm324, %v636, 0
      %v673 = vsel %vm324, %v637, 0
      %v676 = vsel %vm324, %v638, 0
      %678 = vmatprep.subr.bf16.mxu0 0
      %679 = vmatpush1.bf16.msra.mxu0 %v652
      %680 = vmatprep.subr.bf16.mxu0 0
      %681 = vmatpush1.bf16.msra.mxu0 0
      %682 = vmatprep.subr.bf16.mxu0 0
      %683 = vmatpush1.bf16.msra.mxu0 0
      %684 = vmatprep.subr.bf16.mxu0 0
      %685 = vmatpush1.bf16.msra.mxu0 0
      %686 = vmatprep.subr.bf16.mxu0 0
      %687 = vmatpush1.bf16.msra.mxu0 0
      %688 = vmatprep.subr.bf16.mxu0 0
      %689 = vmatpush1.bf16.msra.mxu0 0
      %690 = vmatprep.subr.bf16.mxu0 0
      %691 = vmatpush1.bf16.msra.mxu0 0
      %692 = vmatprep.subr.bf16.mxu0 0
      %693 = vmatpush1.bf16.msra.mxu0 0
      %694 = vmatprep.subr.bf16.mxu0 0
      %695 = vmatpush1.bf16.msra.mxu0 0
      %696 = vmatprep.subr.bf16.mxu0 0
      %697 = vmatpush1.bf16.msra.mxu0 0
      %698 = vmatprep.subr.bf16.mxu0 0
      %699 = vmatpush1.bf16.msra.mxu0 0
      %700 = vmatprep.subr.bf16.mxu0 0
      %701 = vmatpush1.bf16.msra.mxu0 0
      %702 = vmatprep.subr.bf16.mxu0 0
      %703 = vmatpush1.bf16.msra.mxu0 0
      %704 = vmatprep.subr.bf16.mxu0 0
      %705 = vmatpush1.bf16.msra.mxu0 0
      %706 = vmatprep.subr.bf16.mxu0 0
      %707 = vmatpush1.bf16.msra.mxu0 0
      %708 = vmatprep.subr.bf16.mxu0 0
      %709 = vmatpush1.bf16.msra.mxu0 0
      %710 = vmatprep.mubr.bf16.mxu0 0
      %711 = vmatmul.mubr.bf16.gmra.mrb[0].mxu0 %v655
      %v712 = vpop.f32.mrb[0].mxu0
      %v713 = vadd.f32 %v646, %v712
      %v714 = vpop.f32.mrb[0].mxu0
      %v715 = vpop.f32.mrb[0].mxu0
      %v716 = vadd.f32 %v646, %v715
      %v717 = vpop.f32.mrb[0].mxu0
      %718 = vmatprep.mubr.bf16.mxu0 0
      %719 = vmatmul.mubr.bf16.gmra.mrb[0].mxu0 %v658
      %v720 = vpop.f32.mrb[0].mxu0
      %v721 = vadd.f32 %v646, %v720
      %v722 = vpop.f32.mrb[0].mxu0
      %v723 = vpop.f32.mrb[0].mxu0
      %v724 = vadd.f32 %v646, %v723
      %v725 = vpop.f32.mrb[0].mxu0
      %726 = vmatprep.mubr.bf16.mxu0 0
      %727 = vmatmul.mubr.bf16.gmra.mrb[0].mxu0 %v661
      %v728 = vpop.f32.mrb[0].mxu0
      %v729 = vadd.f32 %v646, %v728
      %v730 = vpop.f32.mrb[0].mxu0
      %v731 = vpop.f32.mrb[0].mxu0
      %v732 = vadd.f32 %v646, %v731
      %v733 = vpop.f32.mrb[0].mxu0
      %734 = vmatprep.mubr.bf16.mxu0 0
      %735 = vmatmul.mubr.bf16.gmra.mrb[0].mxu0 %v664
      %v736 = vpop.f32.mrb[0].mxu0
      %v737 = vadd.f32 %v646, %v736
      %v738 = vpop.f32.mrb[0].mxu0
      %v739 = vpop.f32.mrb[0].mxu0
      %v740 = vadd.f32 %v646, %v739
      %v741 = vpop.f32.mrb[0].mxu0
      %742 = vmatprep.mubr.bf16.mxu0 0
      %743 = vmatmul.mubr.bf16.gmra.mrb[0].mxu0 %v667
      %v744 = vpop.f32.mrb[0].mxu0
      %v745 = vadd.f32 %v646, %v744
      %v746 = vpop.f32.mrb[0].mxu0
      %v747 = vpop.f32.mrb[0].mxu0
      %v748 = vadd.f32 %v646, %v747
      %v749 = vpop.f32.mrb[0].mxu0
      %750 = vmatprep.mubr.bf16.mxu0 0
      %751 = vmatmul.mubr.bf16.gmra.mrb[0].mxu0 %v670
      %v752 = vpop.f32.mrb[0].mxu0
      %v753 = vadd.f32 %v646, %v752
      %v754 = vpop.f32.mrb[0].mxu0
      %v755 = vpop.f32.mrb[0].mxu0
      %v756 = vadd.f32 %v646, %v755
      %v757 = vpop.f32.mrb[0].mxu0
      %758 = vmatprep.mubr.bf16.mxu0 0
      %759 = vmatmul.mubr.bf16.gmra.mrb[0].mxu0 %v673
      %v760 = vpop.f32.mrb[0].mxu0
      %v761 = vadd.f32 %v646, %v760
      %v762 = vpop.f32.mrb[0].mxu0
      %v763 = vpop.f32.mrb[0].mxu0
      %v764 = vadd.f32 %v646, %v763
      %v765 = vpop.f32.mrb[0].mxu0
      %766 = vmatprep.mubr.bf16.mxu0 0
      %767 = vmatmul.mubr.bf16.gmra.mrb[0].mxu0 %v676
      %v768 = vpop.f32.mrb[0].mxu0
      %v769 = vadd.f32 %v646, %v768
      %v770 = vpop.f32.mrb[0].mxu0
      %v771 = vpop.f32.mrb[0].mxu0
      %v772 = vadd.f32 %v646, %v771
      %v773 = vpop.f32.mrb[0].mxu0
      %774 = vdwg.mxu0
      %vm775 = vcmask 7168
      %776 = vst.msk [vmem:[%s282] sm:$0xff] %vm775, %v713
      %777 = vst.msk [vmem:[%s282 + $0x8] sm:$0xff] %vm775, %v716
      %778 = vst.msk [vmem:[%s282 + $0x10] sm:$0xff] %vm775, %v721
      %779 = vst.msk [vmem:[%s282 + $0x18] sm:$0xff] %vm775, %v724
      %780 = vst.msk [vmem:[%s282 + $0x20] sm:$0xff] %vm775, %v729
      %781 = vst.msk [vmem:[%s282 + $0x28] sm:$0xff] %vm775, %v732
      %782 = vst.msk [vmem:[%s282 + $0x30] sm:$0xff] %vm775, %v737
      %783 = vst.msk [vmem:[%s282 + $0x38] sm:$0xff] %vm775, %v740
      %784 = vst.msk [vmem:[%s282 + $0x40] sm:$0xff] %vm775, %v745
      %785 = vst.msk [vmem:[%s282 + $0x48] sm:$0xff] %vm775, %v748
      %786 = vst.msk [vmem:[%s282 + $0x50] sm:$0xff] %vm775, %v753
      %787 = vst.msk [vmem:[%s282 + $0x58] sm:$0xff] %vm775, %v756
      %788 = vst.msk [vmem:[%s282 + $0x60] sm:$0xff] %vm775, %v761
      %789 = vst.msk [vmem:[%s282 + $0x68] sm:$0xff] %vm775, %v764
      %790 = vst.msk [vmem:[%s282 + $0x70] sm:$0xff] %vm775, %v769
      %791 = vst.msk [vmem:[%s282 + $0x78] sm:$0xff] %vm775, %v772
      %s792 = smul.u32 16, %s20
      %p793 = scmp.lt.s32.totalorder %s792, 31
      %s794 = scalar_select %p793, %s792, 31
      %s795 = smul.addr %s794, 8
      %s796 = scalar_lea.vmem %s7, %s795
      // Predicated region
      $region49: #{_mlp_forward_impl.1} parent=47 // pred_check
        %p797 = pneg %p190
      $region50: #{_mlp_forward_impl.1} parent=47 // pred_check_branch
        %799 = sbr.rel (%p797) target = $region52
      $region51: #{_mlp_forward_impl.1} parent=47 // pred_region
        %s800 = smul.u32 16, %s20
      $region52: #{_mlp_forward_impl.1} parent=47 // pred_fallthru
        _
    $region48: #{_mlp_forward_impl.1} parent=5 // pred_fallthru
      _
    %p801 = scmp.le.s32.totalorder 2, %s15
    // Predicated region
    $region53: #{_mlp_forward_impl.1} parent=5 // pred_check
      %p802 = pneg %p801
    $region54: #{_mlp_forward_impl.1} parent=5 // pred_check_branch
      %804 = sbr.rel (%p802) target = $region56
    $region55: #{_mlp_forward_impl.1} parent=5 // pred_region
      %s805 = ssub.s32 %s15, 2
      // Predicated region
      $region57: #{_mlp_forward_impl.1} parent=55 // pred_check
        %p806 = pneg %p196
      $region58: #{_mlp_forward_impl.1} parent=55 // pred_check_branch
        %808 = sbr.rel (%p806) target = $region60
      $region59: #{_mlp_forward_impl.1} parent=55 // pred_region
        %s809 = smul.u32 16, %s21
        %p810 = scmp.lt.s32.totalorder %s809, 31
        %s811 = scalar_select %p810, %s809, 31
        %s812 = smul.addr %s811, 8
        %s813 = scalar_lea.vmem %s7, %s812
      $region60: #{_mlp_forward_impl.1} parent=55 // pred_fallthru
        _
    $region56: #{_mlp_forward_impl.1} parent=5 // pred_fallthru
      _
  $region6: #{_mlp_forward_impl.1} parent=0 // loop_footer
    %s19 = sadd.s32 1, %s15
  $region7: #{_mlp_forward_impl.1} parent=0 // loop_footer_branch
    %14 = sbr.rel target = $region3
  $region8: #{_mlp_forward_impl.1} parent=0 // loop_exit
    _

</llo_original>
